<compile_context>
chip_gen: v7x
topology: tpu7x:2x2x1
jax: 0.10.0
libtpu: 0.0.40
codegen_flags: <defaults>
</compile_context>

<pallas_src>
import math

import jax
import jax.numpy as jnp
from jax.experimental import pallas as pl
from jax.experimental.pallas import tpu as pltpu


def _sa_kernel(x_ref, w1big_ref, b1big_ref, sumh_ref, w2t_ref, b2_ref,
               selc_ref, ggrp_ref, exp1_ref, out_ref):
    x = x_ref[...]                                             # (B*c, h*w) f32

    # ---- attention 1: relu(l1(x)) -> sum_j / sqrt(h) -> softmax over h ------
    a1 = jnp.dot(x, w1big_ref[...], preferred_element_type=jnp.float32)
    a1 = jnp.maximum(a1 + b1big_ref[...], 0.0)                 # (B*c, h*h)
    s1 = jnp.dot(a1, sumh_ref[...],                            # (B*c, h)
                 preferred_element_type=jnp.float32)           # 1/sqrt(h) folded into sumh
    m1 = jnp.max(s1, axis=-1, keepdims=True)                   # per-(n,c)-group max
    e1 = jnp.exp(s1 - m1)
    d1 = jnp.sum(e1, axis=-1, keepdims=True)
    aw1 = e1 * pl.reciprocal(d1, approx=True)                  # (B*c, h)

    # ---- attention 2: relu(l2(x)) -> sum_k / sqrt(c) -> softmax over c ------
    a2 = jnp.dot(x, w2t_ref[...], preferred_element_type=jnp.float32)
    a2 = jnp.maximum(a2 + b2_ref[...], 0.0)                    # (B*c, c)
    s2 = jnp.sum(a2, axis=-1, keepdims=True)                   # (B*c, 1)
    # spread[r, ch] = s2 of channel ch of row r's sample, scaled by 1/sqrt(c)
    spread = jnp.dot(ggrp_ref[...], selc_ref[...] * s2,
                     preferred_element_type=jnp.float32)       # (B*c, c)
    m2 = jnp.max(spread, axis=-1, keepdims=True)               # per-sample max
    e2 = jnp.exp(spread - m2)
    num2 = jnp.sum(selc_ref[...] * e2, axis=-1, keepdims=True) # this row's own exp term
    d2 = jnp.sum(e2, axis=-1, keepdims=True)
    aw2 = num2 * pl.reciprocal(d2, approx=True)                # (B*c, 1)

    # ---- fused scale, single lane-dense (h*w wide) multiply + store ---------
    scale = jnp.dot(aw1 * aw2, exp1_ref[...],
                    preferred_element_type=jnp.float32)        # (B*c, h*w)
    out_ref[...] = (x * scale).astype(out_ref.dtype)


def _choose_batch_block(N, c):
    """Samples per grid step B.

    B*c must be a multiple of 8 (sublane tiling).  Target ~256 MXU sublane rows
    per step, keep at least two grid steps when N allows (v7x has 2 TensorCores),
    never exceed the (padded) batch.  Per-step VMEM at these sizes is ~1 MiB,
    well inside the 32 MiB scoped default on v5e/v6e/v7x, so no vmem_limit bump
    is needed.
    """
    m = 8 // math.gcd(c, 8)                      # minimal B so that B*c % 8 == 0
    b = max(m, ((256 // max(c, 1)) // m) * m)    # ~256 sublane rows per step
    if N >= 2 * m:                               # keep >= 2 grid steps if possible
        b = min(b, max(m, ((N // 2) // m) * m))
    b = min(b, max(m, ((N + m - 1) // m) * m))   # no bigger than padded N
    return b


def sa_model_forward(x, w1, b1, w2, b2):
    """Pallas implementation of SaModel.forward.  x: (N, c, h, w) float32."""
    N, c, h, w = x.shape
    hw = h * w
    B = _choose_batch_block(N, c)
    n_pad = ((N + B - 1) // B) * B
    Bc = B * c

    xr = x.reshape(N * c, hw)                    # row-major view, free
    if n_pad != N:                               # zero-pad: NaN-safe, sliced off below
        xr = jnp.concatenate(
            [xr, jnp.zeros(((n_pad - N) * c, hw), x.dtype)], axis=0)

    f32 = jnp.float32
    eye_h = jnp.eye(h, dtype=f32)
    # l1 path constants: block-diagonal weight keeps everything in (B*c, *) layout.
    w1big = jnp.kron(eye_h, w1.T.astype(f32))                       # (h*w, h*h)
    b1big = jnp.tile(b1.astype(f32), h).reshape(1, h * h)           # (1, h*h)
    sumh = jnp.kron(eye_h, jnp.ones((h, 1), f32)) / math.sqrt(h)    # (h*h, h)
    exp1 = jnp.kron(eye_h, jnp.ones((1, w), f32))                   # (h, h*w)
    # l2 path constants.
    w2t = w2.T.astype(f32)                                          # (h*w, c)
    b2r = b2.astype(f32).reshape(1, c)                              # (1, c)
    # Grouped (per-sample) softmax helpers: groups of c consecutive rows.
    selc = jnp.tile(jnp.eye(c, dtype=f32), (B, 1))                  # (B*c, c)
    ggrp = jnp.kron(jnp.eye(B, dtype=f32),
                    jnp.ones((c, c), f32)) / math.sqrt(c)           # (B*c, B*c)

    out = pl.pallas_call(
        _sa_kernel,
        out_shape=jax.ShapeDtypeStruct((n_pad * c, hw), x.dtype),
        grid_spec=pltpu.PrefetchScalarGridSpec(
            num_scalar_prefetch=0,
            grid=(n_pad // B,),
            in_specs=[
                pl.BlockSpec((Bc, hw), lambda i: (i, 0)),        # x rows
                pl.BlockSpec((hw, h * h), lambda i: (0, 0)),     # W1big (block-diag)
                pl.BlockSpec((1, h * h), lambda i: (0, 0)),      # b1 tiled
                pl.BlockSpec((h * h, h), lambda i: (0, 0)),      # group-sum / sqrt(h)
                pl.BlockSpec((hw, c), lambda i: (0, 0)),         # W2^T
                pl.BlockSpec((1, c), lambda i: (0, 0)),          # b2
                pl.BlockSpec((Bc, c), lambda i: (0, 0)),         # channel selector
                pl.BlockSpec((Bc, Bc), lambda i: (0, 0)),        # sample spread / sqrt(c)
                pl.BlockSpec((h, hw), lambda i: (0, 0)),         # h -> h*w expander
            ],
            out_specs=pl.BlockSpec((Bc, hw), lambda i: (i, 0)),
        ),
        compiler_params=pltpu.CompilerParams(
            dimension_semantics=("parallel",)),
    )(xr, w1big, b1big, sumh, w2t, b2r, selc, ggrp, exp1)

    return out[:N * c].reshape(N, c, h, w)


def sa_model_reference(x, w1, b1, w2, b2):
    """Pure-JAX reference matching the PyTorch forward exactly."""
    N, c, h, w = x.shape
    atten = jax.nn.relu(jnp.einsum('nchw,jw->nchj', x, w1) + b1)          # (N, c, h, h)
    aw1 = jax.nn.softmax(jnp.sum(atten, axis=3) / math.sqrt(h), axis=2)   # (N, c, h)
    aw1 = aw1[..., None]                                                  # (N, c, h, 1)
    atten2 = jax.nn.relu(x.reshape(N, c, h * w) @ w2.T + b2)              # (N, c, c)
    aw2 = jax.nn.softmax(jnp.sum(atten2, axis=2) / math.sqrt(c), axis=1)  # (N, c)
    aw2 = aw2[:, :, None, None]                                           # (N, c, 1, 1)
    return x * aw1 * aw2


if __name__ == "__main__":
    # Small shapes consistent with SaModel(c, h, w): x is (N, c, h, w).
    N, C, H, W = 2, 4, 16, 16

    key = jax.random.PRNGKey(0)
    kx, k1, k2, k3, k4, kx2 = jax.random.split(key, 6)

    x = jax.random.normal(kx, (N, C, H, W), dtype=jnp.float32)
    # nn.Linear(w, h): weight (h, w), bias (h);  nn.Linear(h*w, c): weight (c, h*w), bias (c).
    w1 = jax.random.normal(k1, (H, W), dtype=jnp.float32) * 0.1
    b1 = jax.random.normal(k2, (H,), dtype=jnp.float32) * 0.1
    w2 = jax.random.normal(k3, (C, H * W), dtype=jnp.float32) * 0.05
    b2 = jax.random.normal(k4, (C,), dtype=jnp.float32) * 0.1

    out = jax.block_until_ready(sa_model_forward(x, w1, b1, w2, b2))
    ref = sa_model_reference(x, w1, b1, w2, b2)
    assert out.shape == (N, C, H, W)
    # Slightly loosened tolerance: softmax denominators use the EUP approximate reciprocal.
    assert jnp.allclose(out, ref, rtol=5e-3, atol=1e-3), "mismatch vs reference"

    # Second shape exercises batch padding and a multi-step grid.
    N2 = 5
    x2 = jax.random.normal(kx2, (N2, C, H, W), dtype=jnp.float32)
    out2 = jax.block_until_ready(sa_model_forward(x2, w1, b1, w2, b2))
    ref2 = sa_model_reference(x2, w1, b1, w2, b2)
    assert out2.shape == (N2, C, H, W)
    assert jnp.allclose(out2, ref2, rtol=5e-3, atol=1e-3), "mismatch vs reference (N=5)"

    print("KERNEL_OK")
</pallas_src>

<mosaic_0001>
module attributes {stable_mosaic.version = 11 : i64} {
  func.func @_sa_kernel(%arg0: i32, %arg1: memref<8x256xf32, #tpu.memory_space<vmem>>, %arg2: memref<256x256xf32, #tpu.memory_space<vmem>>, %arg3: memref<1x256xf32, #tpu.memory_space<vmem>>, %arg4: memref<256x16xf32, #tpu.memory_space<vmem>>, %arg5: memref<256x4xf32, #tpu.memory_space<vmem>>, %arg6: memref<1x4xf32, #tpu.memory_space<vmem>>, %arg7: memref<8x4xf32, #tpu.memory_space<vmem>>, %arg8: memref<8x8xf32, #tpu.memory_space<vmem>>, %arg9: memref<16x256xf32, #tpu.memory_space<vmem>>, %arg10: memref<8x256xf32, #tpu.memory_space<vmem>>) attributes {dimension_semantics = [#tpu.dimension_semantics<parallel>], iteration_bounds = array<i64: 1>, scalar_prefetch = 0 : i64, scratch_operands = 0 : i64, tpu.core_type = #tpu.core_type<tc>, window_params = [{transform_indices = @transform_0, window_bounds = array<i64: 8, 256>}, {pipeline_mode = #tpu.pipeline_mode<synchronous>, transform_indices = @transform_1, window_bounds = array<i64: 256, 256>}, {pipeline_mode = #tpu.pipeline_mode<synchronous>, transform_indices = @transform_2, window_bounds = array<i64: 1, 256>}, {pipeline_mode = #tpu.pipeline_mode<synchronous>, transform_indices = @transform_3, window_bounds = array<i64: 256, 16>}, {pipeline_mode = #tpu.pipeline_mode<synchronous>, transform_indices = @transform_4, window_bounds = array<i64: 256, 4>}, {pipeline_mode = #tpu.pipeline_mode<synchronous>, transform_indices = @transform_5, window_bounds = array<i64: 1, 4>}, {pipeline_mode = #tpu.pipeline_mode<synchronous>, transform_indices = @transform_6, window_bounds = array<i64: 8, 4>}, {pipeline_mode = #tpu.pipeline_mode<synchronous>, transform_indices = @transform_7, window_bounds = array<i64: 8, 8>}, {pipeline_mode = #tpu.pipeline_mode<synchronous>, transform_indices = @transform_8, window_bounds = array<i64: 16, 256>}, {transform_indices = @transform_9, window_bounds = array<i64: 8, 256>}]} {
    %c0 = arith.constant 0 : index
    %c0_0 = arith.constant 0 : index
    %0 = vector.load %arg1[%c0, %c0_0] : memref<8x256xf32, #tpu.memory_space<vmem>>, vector<8x256xf32>
    %c0_1 = arith.constant 0 : index
    %c0_2 = arith.constant 0 : index
    %1 = vector.load %arg2[%c0_1, %c0_2] : memref<256x256xf32, #tpu.memory_space<vmem>>, vector<256x256xf32>
    %cst = arith.constant dense<0.000000e+00> : vector<8x256xf32>
    %2 = tpu.matmul %0, %1, %cst {dimension_numbers = #tpu.dot_dimension_numbers<[1], [0], [0], [1], [0, 0, 1, 1], [], []>} : vector<8x256xf32>, vector<256x256xf32>, vector<8x256xf32> -> vector<8x256xf32>
    %c0_3 = arith.constant 0 : index
    %c0_4 = arith.constant 0 : index
    %3 = vector.load %arg3[%c0_3, %c0_4] : memref<1x256xf32, #tpu.memory_space<vmem>>, vector<1x256xf32>
    %4 = vector.broadcast %3 : vector<1x256xf32> to vector<8x256xf32>
    %5 = arith.addf %2, %4 : vector<8x256xf32>
    %cst_5 = arith.constant 0.000000e+00 : f32
    %6 = vector.broadcast %cst_5 : f32 to vector<8x256xf32>
    %7 = arith.maximumf %5, %6 : vector<8x256xf32>
    %c0_6 = arith.constant 0 : index
    %c0_7 = arith.constant 0 : index
    %8 = vector.load %arg4[%c0_6, %c0_7] : memref<256x16xf32, #tpu.memory_space<vmem>>, vector<256x16xf32>
    %cst_8 = arith.constant dense<0.000000e+00> : vector<8x16xf32>
    %9 = tpu.matmul %7, %8, %cst_8 {dimension_numbers = #tpu.dot_dimension_numbers<[1], [0], [0], [1], [0, 0, 1, 1], [], []>} : vector<8x256xf32>, vector<256x16xf32>, vector<8x16xf32> -> vector<8x16xf32>
    %cst_9 = arith.constant dense<0xFF800000> : vector<8xf32>
    %10 = vector.multi_reduction <maximumf>, %9, %cst_9 [1] : vector<8x16xf32> to vector<8xf32>
    %11 = vector.shape_cast %10 : vector<8xf32> to vector<8x1xf32>
    %12 = vector.broadcast %11 : vector<8x1xf32> to vector<8x16xf32>
    %13 = arith.subf %9, %12 : vector<8x16xf32>
    %14 = math.exp %13 : vector<8x16xf32>
    %cst_10 = arith.constant dense<0.000000e+00> : vector<8xf32>
    %15 = vector.multi_reduction <add>, %14, %cst_10 [1] : vector<8x16xf32> to vector<8xf32>
    %16 = vector.shape_cast %15 : vector<8xf32> to vector<8x1xf32>
    %17 = tpu.reciprocal %16 {approx = true} : vector<8x1xf32> -> vector<8x1xf32>
    %18 = vector.broadcast %17 : vector<8x1xf32> to vector<8x16xf32>
    %19 = arith.mulf %14, %18 : vector<8x16xf32>
    %c0_11 = arith.constant 0 : index
    %c0_12 = arith.constant 0 : index
    %20 = vector.load %arg5[%c0_11, %c0_12] : memref<256x4xf32, #tpu.memory_space<vmem>>, vector<256x4xf32>
    %cst_13 = arith.constant dense<0.000000e+00> : vector<8x4xf32>
    %21 = tpu.matmul %0, %20, %cst_13 {dimension_numbers = #tpu.dot_dimension_numbers<[1], [0], [0], [1], [0, 0, 1, 1], [], []>} : vector<8x256xf32>, vector<256x4xf32>, vector<8x4xf32> -> vector<8x4xf32>
    %c0_14 = arith.constant 0 : index
    %c0_15 = arith.constant 0 : index
    %22 = vector.load %arg6[%c0_14, %c0_15] : memref<1x4xf32, #tpu.memory_space<vmem>>, vector<1x4xf32>
    %23 = vector.broadcast %22 : vector<1x4xf32> to vector<8x4xf32>
    %24 = arith.addf %21, %23 : vector<8x4xf32>
    %cst_16 = arith.constant 0.000000e+00 : f32
    %25 = vector.broadcast %cst_16 : f32 to vector<8x4xf32>
    %26 = arith.maximumf %24, %25 : vector<8x4xf32>
    %cst_17 = arith.constant dense<0.000000e+00> : vector<8xf32>
    %27 = vector.multi_reduction <add>, %26, %cst_17 [1] : vector<8x4xf32> to vector<8xf32>
    %28 = vector.shape_cast %27 : vector<8xf32> to vector<8x1xf32>
    %c0_18 = arith.constant 0 : index
    %c0_19 = arith.constant 0 : index
    %29 = vector.load %arg8[%c0_18, %c0_19] : memref<8x8xf32, #tpu.memory_space<vmem>>, vector<8x8xf32>
    %c0_20 = arith.constant 0 : index
    %c0_21 = arith.constant 0 : index
    %30 = vector.load %arg7[%c0_20, %c0_21] : memref<8x4xf32, #tpu.memory_space<vmem>>, vector<8x4xf32>
    %31 = vector.broadcast %28 : vector<8x1xf32> to vector<8x4xf32>
    %32 = arith.mulf %30, %31 : vector<8x4xf32>
    %cst_22 = arith.constant dense<0.000000e+00> : vector<8x4xf32>
    %33 = tpu.matmul %29, %32, %cst_22 {dimension_numbers = #tpu.dot_dimension_numbers<[1], [0], [0], [1], [0, 0, 1, 1], [], []>} : vector<8x8xf32>, vector<8x4xf32>, vector<8x4xf32> -> vector<8x4xf32>
    %cst_23 = arith.constant dense<0xFF800000> : vector<8xf32>
    %34 = vector.multi_reduction <maximumf>, %33, %cst_23 [1] : vector<8x4xf32> to vector<8xf32>
    %35 = vector.shape_cast %34 : vector<8xf32> to vector<8x1xf32>
    %36 = vector.broadcast %35 : vector<8x1xf32> to vector<8x4xf32>
    %37 = arith.subf %33, %36 : vector<8x4xf32>
    %38 = math.exp %37 : vector<8x4xf32>
    %c0_24 = arith.constant 0 : index
    %c0_25 = arith.constant 0 : index
    %39 = vector.load %arg7[%c0_24, %c0_25] : memref<8x4xf32, #tpu.memory_space<vmem>>, vector<8x4xf32>
    %40 = arith.mulf %39, %38 : vector<8x4xf32>
    %cst_26 = arith.constant dense<0.000000e+00> : vector<8xf32>
    %41 = vector.multi_reduction <add>, %40, %cst_26 [1] : vector<8x4xf32> to vector<8xf32>
    %42 = vector.shape_cast %41 : vector<8xf32> to vector<8x1xf32>
    %cst_27 = arith.constant dense<0.000000e+00> : vector<8xf32>
    %43 = vector.multi_reduction <add>, %38, %cst_27 [1] : vector<8x4xf32> to vector<8xf32>
    %44 = vector.shape_cast %43 : vector<8xf32> to vector<8x1xf32>
    %45 = tpu.reciprocal %44 {approx = true} : vector<8x1xf32> -> vector<8x1xf32>
    %46 = arith.mulf %42, %45 : vector<8x1xf32>
    %47 = vector.broadcast %46 : vector<8x1xf32> to vector<8x16xf32>
    %48 = arith.mulf %19, %47 : vector<8x16xf32>
    %c0_28 = arith.constant 0 : index
    %c0_29 = arith.constant 0 : index
    %49 = vector.load %arg9[%c0_28, %c0_29] : memref<16x256xf32, #tpu.memory_space<vmem>>, vector<16x256xf32>
    %cst_30 = arith.constant dense<0.000000e+00> : vector<8x256xf32>
    %50 = tpu.matmul %48, %49, %cst_30 {dimension_numbers = #tpu.dot_dimension_numbers<[1], [0], [0], [1], [0, 0, 1, 1], [], []>} : vector<8x16xf32>, vector<16x256xf32>, vector<8x256xf32> -> vector<8x256xf32>
    %51 = arith.mulf %0, %50 : vector<8x256xf32>
    %c0_31 = arith.constant 0 : index
    %c0_32 = arith.constant 0 : index
    %52 = vector.load %arg10[%c0_31, %c0_32] : memref<8x256xf32, #tpu.memory_space<vmem>>, vector<8x256xf32>
    tpu.vector_store %arg10[%c0_31, %c0_32], %51 {strides = array<i32>} : memref<8x256xf32, #tpu.memory_space<vmem>>, vector<8x256xf32>,
    return
  }
  func.func @transform_0(%arg0: i32) -> (i32, i32) {
    %c0_i32 = arith.constant 0 : i32
    %c0_i32_0 = arith.constant 0 : i32
    return %arg0, %c0_i32 : i32, i32
  }
  func.func @transform_1(%arg0: i32) -> (i32, i32) {
    %c0_i32 = arith.constant 0 : i32
    %c0_i32_0 = arith.constant 0 : i32
    %c0_i32_1 = arith.constant 0 : i32
    return %c0_i32, %c0_i32_0 : i32, i32
  }
  func.func @transform_2(%arg0: i32) -> (i32, i32) {
    %c0_i32 = arith.constant 0 : i32
    %c0_i32_0 = arith.constant 0 : i32
    %c0_i32_1 = arith.constant 0 : i32
    return %c0_i32, %c0_i32_0 : i32, i32
  }
  func.func @transform_3(%arg0: i32) -> (i32, i32) {
    %c0_i32 = arith.constant 0 : i32
    %c0_i32_0 = arith.constant 0 : i32
    %c0_i32_1 = arith.constant 0 : i32
    return %c0_i32, %c0_i32_0 : i32, i32
  }
  func.func @transform_4(%arg0: i32) -> (i32, i32) {
    %c0_i32 = arith.constant 0 : i32
    %c0_i32_0 = arith.constant 0 : i32
    %c0_i32_1 = arith.constant 0 : i32
    return %c0_i32, %c0_i32_0 : i32, i32
  }
  func.func @transform_5(%arg0: i32) -> (i32, i32) {
    %c0_i32 = arith.constant 0 : i32
    %c0_i32_0 = arith.constant 0 : i32
    %c0_i32_1 = arith.constant 0 : i32
    return %c0_i32, %c0_i32_0 : i32, i32
  }
  func.func @transform_6(%arg0: i32) -> (i32, i32) {
    %c0_i32 = arith.constant 0 : i32
    %c0_i32_0 = arith.constant 0 : i32
    %c0_i32_1 = arith.constant 0 : i32
    return %c0_i32, %c0_i32_0 : i32, i32
  }
  func.func @transform_7(%arg0: i32) -> (i32, i32) {
    %c0_i32 = arith.constant 0 : i32
    %c0_i32_0 = arith.constant 0 : i32
    %c0_i32_1 = arith.constant 0 : i32
    return %c0_i32, %c0_i32_0 : i32, i32
  }
  func.func @transform_8(%arg0: i32) -> (i32, i32) {
    %c0_i32 = arith.constant 0 : i32
    %c0_i32_0 = arith.constant 0 : i32
    %c0_i32_1 = arith.constant 0 : i32
    return %c0_i32, %c0_i32_0 : i32, i32
  }
  func.func @transform_9(%arg0: i32) -> (i32, i32) {
    %c0_i32 = arith.constant 0 : i32
    %c0_i32_0 = arith.constant 0 : i32
    return %arg0, %c0_i32 : i32, i32
  }
}

</mosaic_0001>

<llo_original>
// kernel: tpu_custom_call.1
$region0: #{tpu_custom_call.1}
  #allocation0 [shape = 'u32[]', space=smem, size = 0x4, offset = 0x4, fixed_abs, tag = 'smem constant byte address 0x4 - core index']
  #allocation1 [shape = 'u32[144,128]{1,0:T(1,128)}', space=vmem, size = 0x12000, scoped, tag = 'internal scratch']
  %s0 = inlined_call_operand.vmem [shape: f32[8,256], index: 0, kind: input, shape index: {}]
  %s1 = inlined_call_operand.vmem [shape: f32[256,256], index: 1, kind: input, shape index: {}]
  %s2 = inlined_call_operand.vmem [shape: f32[1,256], index: 2, kind: input, shape index: {}]
  %s3 = inlined_call_operand.vmem [shape: f32[256,16], index: 3, kind: input, shape index: {}]
  %s4 = inlined_call_operand.vmem [shape: f32[256,4], index: 4, kind: input, shape index: {}]
  %s5 = inlined_call_operand.hbm [shape: f32[1,4], index: 5, kind: input, shape index: {}]
  %s6 = inlined_call_operand.vmem [shape: f32[8,4], index: 6, kind: input, shape index: {}]
  %s7 = inlined_call_operand.vmem [shape: f32[8,8], index: 7, kind: input, shape index: {}]
  %s8 = inlined_call_operand.vmem [shape: f32[16,256], index: 8, kind: input, shape index: {}]
  %s9 = inlined_call_operand.hbm [shape: f32[8,256], index: 9, kind: output, shape index: {}]
  %s10 = sld [smem:[#allocation0]]
  $region50: #{tpu_custom_call.1} parent=0
    _
  %s12 = ssub.s32 1, %s10
  %s13 = scalar_select 0, %s12, %s10
  $region1: #{tpu_custom_call.1} parent=0
    #allocation2 [shape = 'u8[512]{0}', space=vmem, size = 0x400, scoped, tag = 'input window, operand 5, single buffered']
    #allocation3 [shape = 's32[1]{0}', space=sflag, size = 0x4, scoped, tag = 'scoped memory for tpu_custom_call.1']
    #allocation4 [shape = 's32[1]{0}', space=sflag, size = 0x4, scoped, tag = 'scoped memory for tpu_custom_call.1']
    #allocation5 [shape = 'u8[8192]{0}', space=vmem, size = 0x2000, scoped, tag = 'output window, operand 0, single buffered']
    %14 = vsyncpa [#allocation3], 0
    %15 = vsyncpa [#allocation4], 0
    // Predicated region
    $region2: #{tpu_custom_call.1} parent=1 // pred_check
      _
    $region3: #{tpu_custom_call.1} parent=1 // pred_check_branch
      %17 = sbr.rel (0) target = $region5
    $region4: #{tpu_custom_call.1} parent=1 // pred_region
      _
    $region5: #{tpu_custom_call.1} parent=1 // pred_fallthru
      _
    // Predicated region
    $region6: #{tpu_custom_call.1} parent=1 // pred_check
      _
    $region7: #{tpu_custom_call.1} parent=1 // pred_check_branch
      %19 = sbr.rel (0) target = $region9
    $region8: #{tpu_custom_call.1} parent=1 // pred_region
      _
    $region9: #{tpu_custom_call.1} parent=1 // pred_fallthru
      _
    // Predicated region
    $region10: #{tpu_custom_call.1} parent=1 // pred_check
      _
    $region11: #{tpu_custom_call.1} parent=1 // pred_check_branch
      %21 = sbr.rel (0) target = $region13
    $region12: #{tpu_custom_call.1} parent=1 // pred_region
      _
    $region13: #{tpu_custom_call.1} parent=1 // pred_fallthru
      _
    // Predicated region
    $region14: #{tpu_custom_call.1} parent=1 // pred_check
      _
    $region15: #{tpu_custom_call.1} parent=1 // pred_check_branch
      %23 = sbr.rel (0) target = $region17
    $region16: #{tpu_custom_call.1} parent=1 // pred_region
      _
    $region17: #{tpu_custom_call.1} parent=1 // pred_fallthru
      _
    // Predicated region
    $region18: #{tpu_custom_call.1} parent=1 // pred_check
      _
    $region19: #{tpu_custom_call.1} parent=1 // pred_check_branch
      %25 = sbr.rel (0) target = $region21
    $region20: #{tpu_custom_call.1} parent=1 // pred_region
      _
    $region21: #{tpu_custom_call.1} parent=1 // pred_fallthru
      _
    // Predicated region
    $region22: #{tpu_custom_call.1} parent=1 // pred_check
      _
    $region23: #{tpu_custom_call.1} parent=1 // pred_check_branch
      %27 = sbr.rel (0) target = $region25
    $region24: #{tpu_custom_call.1} parent=1 // pred_region
      %s29 = ssub.s32 16, 16
      %30 = vsyncadd [#allocation3], %s29
      %s32 = sshll.u32 [#allocation2], 4
      %s33 = int_to_ptr.vmem [resolvable:$true] %s32
      %35 = dma.hbm_to_vmem [thread:$0]  %s5, 16, %s33, [#allocation3]
    $region25: #{tpu_custom_call.1} parent=1 // pred_fallthru
      _
    // Predicated region
    $region26: #{tpu_custom_call.1} parent=1 // pred_check
      _
    $region27: #{tpu_custom_call.1} parent=1 // pred_check_branch
      %37 = sbr.rel (0) target = $region29
    $region28: #{tpu_custom_call.1} parent=1 // pred_region
      _
    $region29: #{tpu_custom_call.1} parent=1 // pred_fallthru
      _
    // Predicated region
    $region30: #{tpu_custom_call.1} parent=1 // pred_check
      _
    $region31: #{tpu_custom_call.1} parent=1 // pred_check_branch
      %39 = sbr.rel (0) target = $region33
    $region32: #{tpu_custom_call.1} parent=1 // pred_region
      _
    $region33: #{tpu_custom_call.1} parent=1 // pred_fallthru
      _
    // Predicated region
    $region34: #{tpu_custom_call.1} parent=1 // pred_check
      _
    $region35: #{tpu_custom_call.1} parent=1 // pred_check_branch
      %41 = sbr.rel (0) target = $region37
    $region36: #{tpu_custom_call.1} parent=1 // pred_region
      _
    $region37: #{tpu_custom_call.1} parent=1 // pred_fallthru
      _
    // Predicated region
    $region38: #{tpu_custom_call.1} parent=1 // pred_check
      _
    $region39: #{tpu_custom_call.1} parent=1 // pred_check_branch
      %43 = sbr.rel (0) target = $region41
    $region40: #{tpu_custom_call.1} parent=1 // pred_region
      %44 = dma.done [#allocation3], 16
    $region41: #{tpu_custom_call.1} parent=1 // pred_fallthru
      _
    %v45 = vld [vmem:[%s0] sm:$0xff]
    %v46 = vld [vmem:[%s0 + $0x8] sm:$0xff]
    %v47 = vld [vmem:[%s1] sm:$0xff]
    %v48 = vld [vmem:[%s1 + $0x8] sm:$0xff]
    %v49 = vld [vmem:[%s1 + $0x10] sm:$0xff]
    %v50 = vld [vmem:[%s1 + $0x18] sm:$0xff]
    %v51 = vld [vmem:[%s1 + $0x20] sm:$0xff]
    %v52 = vld [vmem:[%s1 + $0x28] sm:$0xff]
    %v53 = vld [vmem:[%s1 + $0x30] sm:$0xff]
    %v54 = vld [vmem:[%s1 + $0x38] sm:$0xff]
    %v55 = vld [vmem:[%s1 + $0x40] sm:$0xff]
    %v56 = vld [vmem:[%s1 + $0x48] sm:$0xff]
    %v57 = vld [vmem:[%s1 + $0x50] sm:$0xff]
    %v58 = vld [vmem:[%s1 + $0x58] sm:$0xff]
    %v59 = vld [vmem:[%s1 + $0x60] sm:$0xff]
    %v60 = vld [vmem:[%s1 + $0x68] sm:$0xff]
    %v61 = vld [vmem:[%s1 + $0x70] sm:$0xff]
    %v62 = vld [vmem:[%s1 + $0x78] sm:$0xff]
    %v63 = vld [vmem:[%s1 + $0x80] sm:$0xff]
    %v64 = vld [vmem:[%s1 + $0x88] sm:$0xff]
    %v65 = vld [vmem:[%s1 + $0x90] sm:$0xff]
    %v66 = vld [vmem:[%s1 + $0x98] sm:$0xff]
    %v67 = vld [vmem:[%s1 + $0xa0] sm:$0xff]
    %v68 = vld [vmem:[%s1 + $0xa8] sm:$0xff]
    %v69 = vld [vmem:[%s1 + $0xb0] sm:$0xff]
    %v70 = vld [vmem:[%s1 + $0xb8] sm:$0xff]
    %v71 = vld [vmem:[%s1 + $0xc0] sm:$0xff]
    %v72 = vld [vmem:[%s1 + $0xc8] sm:$0xff]
    %v73 = vld [vmem:[%s1 + $0xd0] sm:$0xff]
    %v74 = vld [vmem:[%s1 + $0xd8] sm:$0xff]
    %v75 = vld [vmem:[%s1 + $0xe0] sm:$0xff]
    %v76 = vld [vmem:[%s1 + $0xe8] sm:$0xff]
    %v77 = vld [vmem:[%s1 + $0xf0] sm:$0xff]
    %v78 = vld [vmem:[%s1 + $0xf8] sm:$0xff]
    %v79 = vld [vmem:[%s1 + $0x100] sm:$0xff]
    %v80 = vld [vmem:[%s1 + $0x108] sm:$0xff]
    %v81 = vld [vmem:[%s1 + $0x110] sm:$0xff]
    %v82 = vld [vmem:[%s1 + $0x118] sm:$0xff]
    %v83 = vld [vmem:[%s1 + $0x120] sm:$0xff]
    %v84 = vld [vmem:[%s1 + $0x128] sm:$0xff]
    %v85 = vld [vmem:[%s1 + $0x130] sm:$0xff]
    %v86 = vld [vmem:[%s1 + $0x138] sm:$0xff]
    %v87 = vld [vmem:[%s1 + $0x140] sm:$0xff]
    %v88 = vld [vmem:[%s1 + $0x148] sm:$0xff]
    %v89 = vld [vmem:[%s1 + $0x150] sm:$0xff]
    %v90 = vld [vmem:[%s1 + $0x158] sm:$0xff]
    %v91 = vld [vmem:[%s1 + $0x160] sm:$0xff]
    %v92 = vld [vmem:[%s1 + $0x168] sm:$0xff]
    %v93 = vld [vmem:[%s1 + $0x170] sm:$0xff]
    %v94 = vld [vmem:[%s1 + $0x178] sm:$0xff]
    %v95 = vld [vmem:[%s1 + $0x180] sm:$0xff]
    %v96 = vld [vmem:[%s1 + $0x188] sm:$0xff]
    %v97 = vld [vmem:[%s1 + $0x190] sm:$0xff]
    %v98 = vld [vmem:[%s1 + $0x198] sm:$0xff]
    %v99 = vld [vmem:[%s1 + $0x1a0] sm:$0xff]
    %v100 = vld [vmem:[%s1 + $0x1a8] sm:$0xff]
    %v101 = vld [vmem:[%s1 + $0x1b0] sm:$0xff]
    %v102 = vld [vmem:[%s1 + $0x1b8] sm:$0xff]
    %v103 = vld [vmem:[%s1 + $0x1c0] sm:$0xff]
    %v104 = vld [vmem:[%s1 + $0x1c8] sm:$0xff]
    %v105 = vld [vmem:[%s1 + $0x1d0] sm:$0xff]
    %v106 = vld [vmem:[%s1 + $0x1d8] sm:$0xff]
    %v107 = vld [vmem:[%s1 + $0x1e0] sm:$0xff]
    %v108 = vld [vmem:[%s1 + $0x1e8] sm:$0xff]
    %v109 = vld [vmem:[%s1 + $0x1f0] sm:$0xff]
    %v110 = vld [vmem:[%s1 + $0x1f8] sm:$0xff]
    %v111 = vld [vmem:[%s2] sm:$0x3]
    %v113 = vlaneseq
    %v114 = vshrl.u32 %v113, 7
    %v115 = vsub.s32 0, %v114
    %v116 = vrot.slane %v111, %v115
    %v117 = vlaneseq
    %v118 = vshrl.u32 %v117, 7
    %v119 = vsub.s32 1, %v118
    %v120 = vrot.slane %v111, %v119
    %123 = vmatprep.subr.mxu0 %v48
    %124 = vmatpush1.msra.mxu0 %v47
    %125 = vmatprep.subr.mxu0 %v50
    %126 = vmatpush1.msra.mxu0 %v49
    %127 = vmatprep.subr.mxu0 %v52
    %128 = vmatpush1.msra.mxu0 %v51
    %129 = vmatprep.subr.mxu0 %v54
    %130 = vmatpush1.msra.mxu0 %v53
    %131 = vmatprep.subr.mxu0 %v56
    %132 = vmatpush1.msra.mxu0 %v55
    %133 = vmatprep.subr.mxu0 %v58
    %134 = vmatpush1.msra.mxu0 %v57
    %135 = vmatprep.subr.mxu0 %v60
    %136 = vmatpush1.msra.mxu0 %v59
    %137 = vmatprep.subr.mxu0 %v62
    %138 = vmatpush1.msra.mxu0 %v61
    %139 = vmatprep.subr.mxu0 %v64
    %140 = vmatpush1.msra.mxu0 %v63
    %141 = vmatprep.subr.mxu0 %v66
    %142 = vmatpush1.msra.mxu0 %v65
    %143 = vmatprep.subr.mxu0 %v68
    %144 = vmatpush1.msra.mxu0 %v67
    %145 = vmatprep.subr.mxu0 %v70
    %146 = vmatpush1.msra.mxu0 %v69
    %147 = vmatprep.subr.mxu0 %v72
    %148 = vmatpush1.msra.mxu0 %v71
    %149 = vmatprep.subr.mxu0 %v74
    %150 = vmatpush1.msra.mxu0 %v73
    %151 = vmatprep.subr.mxu0 %v76
    %152 = vmatpush1.msra.mxu0 %v75
    %153 = vmatprep.subr.mxu0 %v78
    %154 = vmatpush1.msra.mxu0 %v77
    %155 = vmatprep.subr.mxu0 %v80
    %156 = vmatpush1.msra.mxu0 %v79
    %157 = vmatprep.subr.mxu0 %v82
    %158 = vmatpush1.msra.mxu0 %v81
    %159 = vmatprep.subr.mxu0 %v84
    %160 = vmatpush1.msra.mxu0 %v83
    %161 = vmatprep.subr.mxu0 %v86
    %162 = vmatpush1.msra.mxu0 %v85
    %163 = vmatprep.subr.mxu0 %v88
    %164 = vmatpush1.msra.mxu0 %v87
    %165 = vmatprep.subr.mxu0 %v90
    %166 = vmatpush1.msra.mxu0 %v89
    %167 = vmatprep.subr.mxu0 %v92
    %168 = vmatpush1.msra.mxu0 %v91
    %169 = vmatprep.subr.mxu0 %v94
    %170 = vmatpush1.msra.mxu0 %v93
    %171 = vmatprep.subr.mxu0 %v96
    %172 = vmatpush1.msra.mxu0 %v95
    %173 = vmatprep.subr.mxu0 %v98
    %174 = vmatpush1.msra.mxu0 %v97
    %175 = vmatprep.subr.mxu0 %v100
    %176 = vmatpush1.msra.mxu0 %v99
    %177 = vmatprep.subr.mxu0 %v102
    %178 = vmatpush1.msra.mxu0 %v101
    %179 = vmatprep.subr.mxu0 %v104
    %180 = vmatpush1.msra.mxu0 %v103
    %181 = vmatprep.subr.mxu0 %v106
    %182 = vmatpush1.msra.mxu0 %v105
    %183 = vmatprep.subr.mxu0 %v108
    %184 = vmatpush1.msra.mxu0 %v107
    %185 = vmatprep.subr.mxu0 %v110
    %186 = vmatpush1.msra.mxu0 %v109
    %187 = vmatprep.mubr.f32.mxu0 %v46
    %188 = vmatmul.mubr.f32.gmra.mrb[0].mxu0 %v45
    %v189 = vpop.f32.mrb[0].mxu0
    %v190 = vadd.f32 %v116, %v189
    %v191 = vpop.f32.mrb[0].mxu0
    %v192 = vadd.f32 %v120, %v191
    %193 = vdwg.mxu0
    %v194 = vmax.f32 %v190, 0.0
    %v195 = vmax.f32 %v192, 0.0
    %v196 = vld [vmem:[%s3] sm:$0xff]
    %v197 = vld [vmem:[%s3 + $0x8] sm:$0xff]
    %v198 = vld [vmem:[%s3 + $0x10] sm:$0xff]
    %v199 = vld [vmem:[%s3 + $0x18] sm:$0xff]
    %v200 = vld [vmem:[%s3 + $0x20] sm:$0xff]
    %v201 = vld [vmem:[%s3 + $0x28] sm:$0xff]
    %v202 = vld [vmem:[%s3 + $0x30] sm:$0xff]
    %v203 = vld [vmem:[%s3 + $0x38] sm:$0xff]
    %v204 = vld [vmem:[%s3 + $0x40] sm:$0xff]
    %v205 = vld [vmem:[%s3 + $0x48] sm:$0xff]
    %v206 = vld [vmem:[%s3 + $0x50] sm:$0xff]
    %v207 = vld [vmem:[%s3 + $0x58] sm:$0xff]
    %v208 = vld [vmem:[%s3 + $0x60] sm:$0xff]
    %v209 = vld [vmem:[%s3 + $0x68] sm:$0xff]
    %v210 = vld [vmem:[%s3 + $0x70] sm:$0xff]
    %v211 = vld [vmem:[%s3 + $0x78] sm:$0xff]
    %v212 = vld [vmem:[%s3 + $0x80] sm:$0xff]
    %v213 = vld [vmem:[%s3 + $0x88] sm:$0xff]
    %v214 = vld [vmem:[%s3 + $0x90] sm:$0xff]
    %v215 = vld [vmem:[%s3 + $0x98] sm:$0xff]
    %v216 = vld [vmem:[%s3 + $0xa0] sm:$0xff]
    %v217 = vld [vmem:[%s3 + $0xa8] sm:$0xff]
    %v218 = vld [vmem:[%s3 + $0xb0] sm:$0xff]
    %v219 = vld [vmem:[%s3 + $0xb8] sm:$0xff]
    %v220 = vld [vmem:[%s3 + $0xc0] sm:$0xff]
    %v221 = vld [vmem:[%s3 + $0xc8] sm:$0xff]
    %v222 = vld [vmem:[%s3 + $0xd0] sm:$0xff]
    %v223 = vld [vmem:[%s3 + $0xd8] sm:$0xff]
    %v224 = vld [vmem:[%s3 + $0xe0] sm:$0xff]
    %v225 = vld [vmem:[%s3 + $0xe8] sm:$0xff]
    %v226 = vld [vmem:[%s3 + $0xf0] sm:$0xff]
    %v227 = vld [vmem:[%s3 + $0xf8] sm:$0xff]
    %228 = vmatprep.subr.mxu0 0.0
    %229 = vmatpush1.msra.mxu0 %v196
    %230 = vmatprep.subr.mxu0 0.0
    %231 = vmatpush1.msra.mxu0 %v197
    %232 = vmatprep.subr.mxu0 0.0
    %233 = vmatpush1.msra.mxu0 %v198
    %234 = vmatprep.subr.mxu0 0.0
    %235 = vmatpush1.msra.mxu0 %v199
    %236 = vmatprep.subr.mxu0 0.0
    %237 = vmatpush1.msra.mxu0 %v200
    %238 = vmatprep.subr.mxu0 0.0
    %239 = vmatpush1.msra.mxu0 %v201
    %240 = vmatprep.subr.mxu0 0.0
    %241 = vmatpush1.msra.mxu0 %v202
    %242 = vmatprep.subr.mxu0 0.0
    %243 = vmatpush1.msra.mxu0 %v203
    %244 = vmatprep.subr.mxu0 0.0
    %245 = vmatpush1.msra.mxu0 %v204
    %246 = vmatprep.subr.mxu0 0.0
    %247 = vmatpush1.msra.mxu0 %v205
    %248 = vmatprep.subr.mxu0 0.0
    %249 = vmatpush1.msra.mxu0 %v206
    %250 = vmatprep.subr.mxu0 0.0
    %251 = vmatpush1.msra.mxu0 %v207
    %252 = vmatprep.subr.mxu0 0.0
    %253 = vmatpush1.msra.mxu0 %v208
    %254 = vmatprep.subr.mxu0 0.0
    %255 = vmatpush1.msra.mxu0 %v209
    %256 = vmatprep.subr.mxu0 0.0
    %257 = vmatpush1.msra.mxu0 %v210
    %258 = vmatprep.subr.mxu0 0.0
    %259 = vmatpush1.msra.mxu0 %v211
    %260 = vmatprep.subr.mxu0 0.0
    %261 = vmatpush1.msra.mxu0 %v212
    %262 = vmatprep.subr.mxu0 0.0
    %263 = vmatpush1.msra.mxu0 %v213
    %264 = vmatprep.subr.mxu0 0.0
    %265 = vmatpush1.msra.mxu0 %v214
    %266 = vmatprep.subr.mxu0 0.0
    %267 = vmatpush1.msra.mxu0 %v215
    %268 = vmatprep.subr.mxu0 0.0
    %269 = vmatpush1.msra.mxu0 %v216
    %270 = vmatprep.subr.mxu0 0.0
    %271 = vmatpush1.msra.mxu0 %v217
    %272 = vmatprep.subr.mxu0 0.0
    %273 = vmatpush1.msra.mxu0 %v218
    %274 = vmatprep.subr.mxu0 0.0
    %275 = vmatpush1.msra.mxu0 %v219
    %276 = vmatprep.subr.mxu0 0.0
    %277 = vmatpush1.msra.mxu0 %v220
    %278 = vmatprep.subr.mxu0 0.0
    %279 = vmatpush1.msra.mxu0 %v221
    %280 = vmatprep.subr.mxu0 0.0
    %281 = vmatpush1.msra.mxu0 %v222
    %282 = vmatprep.subr.mxu0 0.0
    %283 = vmatpush1.msra.mxu0 %v223
    %284 = vmatprep.subr.mxu0 0.0
    %285 = vmatpush1.msra.mxu0 %v224
    %286 = vmatprep.subr.mxu0 0.0
    %287 = vmatpush1.msra.mxu0 %v225
    %288 = vmatprep.subr.mxu0 0.0
    %289 = vmatpush1.msra.mxu0 %v226
    %290 = vmatprep.subr.mxu0 0.0
    %291 = vmatpush1.msra.mxu0 %v227
    %292 = vmatprep.mubr.f32.mxu0 %v195
    %293 = vmatmul.mubr.f32.gmra.mrb[0].mxu0 %v194
    %v294 = vpop.f32.mrb[0].mxu0
    %v295 = vadd.f32 0.0, %v294
    %v296 = vpop.f32.mrb[0].mxu0
    %297 = vdwg.mxu0
    %vm298 = vcmask 130048
    %v299 = vsel %vm298, %v295, -inf
    %300 = vmax.xlane.f32.xlu0 %v299
    %v301 = vpop.xlane.xlu0 %300
    %v302 = vsub.f32 %v295, %v301
    %v303 = vmul.f32 %v302, 1.442695
    %v304 = vpow.pop %v303
    %v305 = vsel %vm298, %v304, 0.0
    %306 = vadd.xlane.f32.xlu0 %v305
    %v307 = vpop.xlane.xlu0 %306
    %v308 = vrcp.pop %v307
    %v309 = vmul.f32 %v304, %v308
    %v310 = vld [vmem:[%s4] sm:$0xff]
    %v311 = vld [vmem:[%s4 + $0x8] sm:$0xff]
    %v312 = vld [vmem:[%s4 + $0x10] sm:$0xff]
    %v313 = vld [vmem:[%s4 + $0x18] sm:$0xff]
    %v314 = vld [vmem:[%s4 + $0x20] sm:$0xff]
    %v315 = vld [vmem:[%s4 + $0x28] sm:$0xff]
    %v316 = vld [vmem:[%s4 + $0x30] sm:$0xff]
    %v317 = vld [vmem:[%s4 + $0x38] sm:$0xff]
    %v318 = vld [vmem:[%s4 + $0x40] sm:$0xff]
    %v319 = vld [vmem:[%s4 + $0x48] sm:$0xff]
    %v320 = vld [vmem:[%s4 + $0x50] sm:$0xff]
    %v321 = vld [vmem:[%s4 + $0x58] sm:$0xff]
    %v322 = vld [vmem:[%s4 + $0x60] sm:$0xff]
    %v323 = vld [vmem:[%s4 + $0x68] sm:$0xff]
    %v324 = vld [vmem:[%s4 + $0x70] sm:$0xff]
    %v325 = vld [vmem:[%s4 + $0x78] sm:$0xff]
    %v326 = vld [vmem:[%s4 + $0x80] sm:$0xff]
    %v327 = vld [vmem:[%s4 + $0x88] sm:$0xff]
    %v328 = vld [vmem:[%s4 + $0x90] sm:$0xff]
    %v329 = vld [vmem:[%s4 + $0x98] sm:$0xff]
    %v330 = vld [vmem:[%s4 + $0xa0] sm:$0xff]
    %v331 = vld [vmem:[%s4 + $0xa8] sm:$0xff]
    %v332 = vld [vmem:[%s4 + $0xb0] sm:$0xff]
    %v333 = vld [vmem:[%s4 + $0xb8] sm:$0xff]
    %v334 = vld [vmem:[%s4 + $0xc0] sm:$0xff]
    %v335 = vld [vmem:[%s4 + $0xc8] sm:$0xff]
    %v336 = vld [vmem:[%s4 + $0xd0] sm:$0xff]
    %v337 = vld [vmem:[%s4 + $0xd8] sm:$0xff]
    %v338 = vld [vmem:[%s4 + $0xe0] sm:$0xff]
    %v339 = vld [vmem:[%s4 + $0xe8] sm:$0xff]
    %v340 = vld [vmem:[%s4 + $0xf0] sm:$0xff]
    %v341 = vld [vmem:[%s4 + $0xf8] sm:$0xff]
    %v342 = vld [vmem:[#allocation2] sm:$0x1]
    %v344 = vlaneseq
    %v345 = vshrl.u32 %v344, 7
    %v346 = vsub.s32 0, %v345
    %v347 = vrot.slane %v342, %v346
    %349 = vmatprep.subr.mxu0 0.0
    %350 = vmatpush1.msra.mxu0 %v310
    %351 = vmatprep.subr.mxu0 0.0
    %352 = vmatpush1.msra.mxu0 %v311
    %353 = vmatprep.subr.mxu0 0.0
    %354 = vmatpush1.msra.mxu0 %v312
    %355 = vmatprep.subr.mxu0 0.0
    %356 = vmatpush1.msra.mxu0 %v313
    %357 = vmatprep.subr.mxu0 0.0
    %358 = vmatpush1.msra.mxu0 %v314
    %359 = vmatprep.subr.mxu0 0.0
    %360 = vmatpush1.msra.mxu0 %v315
    %361 = vmatprep.subr.mxu0 0.0
    %362 = vmatpush1.msra.mxu0 %v316
    %363 = vmatprep.subr.mxu0 0.0
    %364 = vmatpush1.msra.mxu0 %v317
    %365 = vmatprep.subr.mxu0 0.0
    %366 = vmatpush1.msra.mxu0 %v318
    %367 = vmatprep.subr.mxu0 0.0
    %368 = vmatpush1.msra.mxu0 %v319
    %369 = vmatprep.subr.mxu0 0.0
    %370 = vmatpush1.msra.mxu0 %v320
    %371 = vmatprep.subr.mxu0 0.0
    %372 = vmatpush1.msra.mxu0 %v321
    %373 = vmatprep.subr.mxu0 0.0
    %374 = vmatpush1.msra.mxu0 %v322
    %375 = vmatprep.subr.mxu0 0.0
    %376 = vmatpush1.msra.mxu0 %v323
    %377 = vmatprep.subr.mxu0 0.0
    %378 = vmatpush1.msra.mxu0 %v324
    %379 = vmatprep.subr.mxu0 0.0
    %380 = vmatpush1.msra.mxu0 %v325
    %381 = vmatprep.subr.mxu0 0.0
    %382 = vmatpush1.msra.mxu0 %v326
    %383 = vmatprep.subr.mxu0 0.0
    %384 = vmatpush1.msra.mxu0 %v327
    %385 = vmatprep.subr.mxu0 0.0
    %386 = vmatpush1.msra.mxu0 %v328
    %387 = vmatprep.subr.mxu0 0.0
    %388 = vmatpush1.msra.mxu0 %v329
    %389 = vmatprep.subr.mxu0 0.0
    %390 = vmatpush1.msra.mxu0 %v330
    %391 = vmatprep.subr.mxu0 0.0
    %392 = vmatpush1.msra.mxu0 %v331
    %393 = vmatprep.subr.mxu0 0.0
    %394 = vmatpush1.msra.mxu0 %v332
    %395 = vmatprep.subr.mxu0 0.0
    %396 = vmatpush1.msra.mxu0 %v333
    %397 = vmatprep.subr.mxu0 0.0
    %398 = vmatpush1.msra.mxu0 %v334
    %399 = vmatprep.subr.mxu0 0.0
    %400 = vmatpush1.msra.mxu0 %v335
    %401 = vmatprep.subr.mxu0 0.0
    %402 = vmatpush1.msra.mxu0 %v336
    %403 = vmatprep.subr.mxu0 0.0
    %404 = vmatpush1.msra.mxu0 %v337
    %405 = vmatprep.subr.mxu0 0.0
    %406 = vmatpush1.msra.mxu0 %v338
    %407 = vmatprep.subr.mxu0 0.0
    %408 = vmatpush1.msra.mxu0 %v339
    %409 = vmatprep.subr.mxu0 0.0
    %410 = vmatpush1.msra.mxu0 %v340
    %411 = vmatprep.subr.mxu0 0.0
    %412 = vmatpush1.msra.mxu0 %v341
    %413 = vmatprep.mubr.f32.mxu0 %v46
    %414 = vmatmul.mubr.f32.gmra.mrb[0].mxu0 %v45
    %v415 = vpop.f32.mrb[0].mxu0
    %v416 = vadd.f32 %v347, %v415
    %v417 = vpop.f32.mrb[0].mxu0
    %418 = vdwg.mxu0
    %v419 = vmax.f32 %v416, 0.0
    %vm420 = vcmask 31744
    %v421 = vsel %vm420, %v419, 0.0
    %422 = vadd.xlane.f32.xlu0 %v421
    %v423 = vpop.xlane.xlu0 %422
    %v424 = vld [vmem:[%s7] sm:$0xff]
    %v425 = vld [vmem:[%s6] sm:$0xff]
    %v426 = vmul.f32 %v425, %v423
    %vm427 = vcmask 64512
    %v429 = vsel %vm427, %v424, 0
    %431 = vmatprep.subr.mxu0 0.0
    %432 = vmatpush1.msra.mxu0 %v426
    %433 = vmatprep.subr.mxu0 0.0
    %434 = vmatpush1.msra.mxu0 0.0
    %435 = vmatprep.subr.mxu0 0.0
    %436 = vmatpush1.msra.mxu0 0.0
    %437 = vmatprep.subr.mxu0 0.0
    %438 = vmatpush1.msra.mxu0 0.0
    %439 = vmatprep.subr.mxu0 0.0
    %440 = vmatpush1.msra.mxu0 0.0
    %441 = vmatprep.subr.mxu0 0.0
    %442 = vmatpush1.msra.mxu0 0.0
    %443 = vmatprep.subr.mxu0 0.0
    %444 = vmatpush1.msra.mxu0 0.0
    %445 = vmatprep.subr.mxu0 0.0
    %446 = vmatpush1.msra.mxu0 0.0
    %447 = vmatprep.subr.mxu0 0.0
    %448 = vmatpush1.msra.mxu0 0.0
    %449 = vmatprep.subr.mxu0 0.0
    %450 = vmatpush1.msra.mxu0 0.0
    %451 = vmatprep.subr.mxu0 0.0
    %452 = vmatpush1.msra.mxu0 0.0
    %453 = vmatprep.subr.mxu0 0.0
    %454 = vmatpush1.msra.mxu0 0.0
    %455 = vmatprep.subr.mxu0 0.0
    %456 = vmatpush1.msra.mxu0 0.0
    %457 = vmatprep.subr.mxu0 0.0
    %458 = vmatpush1.msra.mxu0 0.0
    %459 = vmatprep.subr.mxu0 0.0
    %460 = vmatpush1.msra.mxu0 0.0
    %461 = vmatprep.subr.mxu0 0.0
    %462 = vmatpush1.msra.mxu0 0.0
    %463 = vmatprep.subr.mxu0 0.0
    %464 = vmatpush1.msra.mxu0 0.0
    %465 = vmatprep.subr.mxu0 0.0
    %466 = vmatpush1.msra.mxu0 0.0
    %467 = vmatprep.subr.mxu0 0.0
    %468 = vmatpush1.msra.mxu0 0.0
    %469 = vmatprep.subr.mxu0 0.0
    %470 = vmatpush1.msra.mxu0 0.0
    %471 = vmatprep.subr.mxu0 0.0
    %472 = vmatpush1.msra.mxu0 0.0
    %473 = vmatprep.subr.mxu0 0.0
    %474 = vmatpush1.msra.mxu0 0.0
    %475 = vmatprep.subr.mxu0 0.0
    %476 = vmatpush1.msra.mxu0 0.0
    %477 = vmatprep.subr.mxu0 0.0
    %478 = vmatpush1.msra.mxu0 0.0
    %479 = vmatprep.subr.mxu0 0.0
    %480 = vmatpush1.msra.mxu0 0.0
    %481 = vmatprep.subr.mxu0 0.0
    %482 = vmatpush1.msra.mxu0 0.0
    %483 = vmatprep.subr.mxu0 0.0
    %484 = vmatpush1.msra.mxu0 0.0
    %485 = vmatprep.subr.mxu0 0.0
    %486 = vmatpush1.msra.mxu0 0.0
    %487 = vmatprep.subr.mxu0 0.0
    %488 = vmatpush1.msra.mxu0 0.0
    %489 = vmatprep.subr.mxu0 0.0
    %490 = vmatpush1.msra.mxu0 0.0
    %491 = vmatprep.subr.mxu0 0.0
    %492 = vmatpush1.msra.mxu0 0.0
    %493 = vmatprep.subr.mxu0 0.0
    %494 = vmatpush1.msra.mxu0 0.0
    %495 = vmatprep.mubr.f32.mxu0 0.0
    %496 = vmatmul.mubr.f32.gmra.mrb[0].mxu0 %v429
    %v497 = vpop.f32.mrb[0].mxu0
    %v498 = vadd.f32 0.0, %v497
    %v499 = vpop.f32.mrb[0].mxu0
    %500 = vdwg.mxu0
    %v501 = vsel %vm420, %v498, -inf
    %502 = vmax.xlane.f32.xlu0 %v501
    %v503 = vpop.xlane.xlu0 %502
    %v504 = vsub.f32 %v498, %v503
    %v505 = vmul.f32 %v504, 1.442695
    %v506 = vpow.pop %v505
    %v507 = vmul.f32 %v425, %v506
    %v508 = vsel %vm420, %v507, 0.0
    %509 = vadd.xlane.f32.xlu0 %v508
    %v510 = vpop.xlane.xlu0 %509
    %v511 = vsel %vm420, %v506, 0.0
    %512 = vadd.xlane.f32.xlu0 %v511
    %v513 = vpop.xlane.xlu0 %512
    %v514 = vrcp.pop %v513
    %v515 = vmul.f32 %v510, %v514
    %v516 = vmul.f32 %v309, %v515
    %v517 = vld [vmem:[%s8] sm:$0xff]
    %v518 = vld [vmem:[%s8 + $0x8] sm:$0xff]
    %v519 = vld [vmem:[%s8 + $0x10] sm:$0xff]
    %v520 = vld [vmem:[%s8 + $0x18] sm:$0xff]
    %v522 = vsel %vm298, %v516, 0
    %524 = vmatprep.subr.mxu0 %v518
    %525 = vmatpush1.msra.mxu0 %v517
    %526 = vmatprep.subr.mxu0 %v520
    %527 = vmatpush1.msra.mxu0 %v519
    %528 = vmatprep.subr.mxu0 0.0
    %529 = vmatpush1.msra.mxu0 0.0
    %530 = vmatprep.subr.mxu0 0.0
    %531 = vmatpush1.msra.mxu0 0.0
    %532 = vmatprep.subr.mxu0 0.0
    %533 = vmatpush1.msra.mxu0 0.0
    %534 = vmatprep.subr.mxu0 0.0
    %535 = vmatpush1.msra.mxu0 0.0
    %536 = vmatprep.subr.mxu0 0.0
    %537 = vmatpush1.msra.mxu0 0.0
    %538 = vmatprep.subr.mxu0 0.0
    %539 = vmatpush1.msra.mxu0 0.0
    %540 = vmatprep.subr.mxu0 0.0
    %541 = vmatpush1.msra.mxu0 0.0
    %542 = vmatprep.subr.mxu0 0.0
    %543 = vmatpush1.msra.mxu0 0.0
    %544 = vmatprep.subr.mxu0 0.0
    %545 = vmatpush1.msra.mxu0 0.0
    %546 = vmatprep.subr.mxu0 0.0
    %547 = vmatpush1.msra.mxu0 0.0
    %548 = vmatprep.subr.mxu0 0.0
    %549 = vmatpush1.msra.mxu0 0.0
    %550 = vmatprep.subr.mxu0 0.0
    %551 = vmatpush1.msra.mxu0 0.0
    %552 = vmatprep.subr.mxu0 0.0
    %553 = vmatpush1.msra.mxu0 0.0
    %554 = vmatprep.subr.mxu0 0.0
    %555 = vmatpush1.msra.mxu0 0.0
    %556 = vmatprep.subr.mxu0 0.0
    %557 = vmatpush1.msra.mxu0 0.0
    %558 = vmatprep.subr.mxu0 0.0
    %559 = vmatpush1.msra.mxu0 0.0
    %560 = vmatprep.subr.mxu0 0.0
    %561 = vmatpush1.msra.mxu0 0.0
    %562 = vmatprep.subr.mxu0 0.0
    %563 = vmatpush1.msra.mxu0 0.0
    %564 = vmatprep.subr.mxu0 0.0
    %565 = vmatpush1.msra.mxu0 0.0
    %566 = vmatprep.subr.mxu0 0.0
    %567 = vmatpush1.msra.mxu0 0.0
    %568 = vmatprep.subr.mxu0 0.0
    %569 = vmatpush1.msra.mxu0 0.0
    %570 = vmatprep.subr.mxu0 0.0
    %571 = vmatpush1.msra.mxu0 0.0
    %572 = vmatprep.subr.mxu0 0.0
    %573 = vmatpush1.msra.mxu0 0.0
    %574 = vmatprep.subr.mxu0 0.0
    %575 = vmatpush1.msra.mxu0 0.0
    %576 = vmatprep.subr.mxu0 0.0
    %577 = vmatpush1.msra.mxu0 0.0
    %578 = vmatprep.subr.mxu0 0.0
    %579 = vmatpush1.msra.mxu0 0.0
    %580 = vmatprep.subr.mxu0 0.0
    %581 = vmatpush1.msra.mxu0 0.0
    %582 = vmatprep.subr.mxu0 0.0
    %583 = vmatpush1.msra.mxu0 0.0
    %584 = vmatprep.subr.mxu0 0.0
    %585 = vmatpush1.msra.mxu0 0.0
    %586 = vmatprep.subr.mxu0 0.0
    %587 = vmatpush1.msra.mxu0 0.0
    %588 = vmatprep.mubr.f32.mxu0 0.0
    %589 = vmatmul.mubr.f32.gmra.mrb[0].mxu0 %v522
    %v590 = vpop.f32.mrb[0].mxu0
    %v591 = vadd.f32 0.0, %v590
    %v592 = vpop.f32.mrb[0].mxu0
    %v593 = vadd.f32 0.0, %v592
    %594 = vdwg.mxu0
    %v595 = vmul.f32 %v45, %v591
    %v596 = vmul.f32 %v46, %v593
    %597 = vst [vmem:[#allocation5] sm:$0xff] %v595
    %598 = vst [vmem:[#allocation5 + $0x8] sm:$0xff] %v596
    // Predicated region
    $region42: #{tpu_custom_call.1} parent=1 // pred_check
      _
    $region43: #{tpu_custom_call.1} parent=1 // pred_check_branch
      %600 = sbr.rel (0) target = $region45
    $region44: #{tpu_custom_call.1} parent=1 // pred_region
      %s602 = ssub.s32 256, 256
      %603 = vsyncadd [#allocation4], %s602
      %s605 = sshll.u32 [#allocation5], 4
      %s606 = int_to_ptr.vmem [resolvable:$true] %s605
      %608 = dma.vmem_to_hbm [thread:$0]  %s606, 256, %s9, [#allocation4]
    $region45: #{tpu_custom_call.1} parent=1 // pred_fallthru
      _
    // Predicated region
    $region46: #{tpu_custom_call.1} parent=1 // pred_check
      _
    $region47: #{tpu_custom_call.1} parent=1 // pred_check_branch
      %610 = sbr.rel (0) target = $region49
    $region48: #{tpu_custom_call.1} parent=1 // pred_region
      %611 = dma.done [#allocation4], 256
    $region49: #{tpu_custom_call.1} parent=1 // pred_fallthru
      _
    %612 = vsyncpa [#allocation3], 1
    %613 = vsyncpa [#allocation4], 1

</llo_original>
